<compile_context>
chip_gen: v7x
topology: tpu7x:2x2x1
jax: 0.10.0
libtpu: 0.0.40
codegen_flags: <defaults>
</compile_context>

<pallas_src>
import math

import jax
import jax.numpy as jnp
from jax import lax
from jax.experimental import pallas as pl
from jax.experimental.pallas import tpu as pltpu


def linear_kernel(x_ref, w_ref, b_ref, o_ref):
    """One (tm, tn) f32 output tile; grid axis 2 (K) is the reduction axis.

    x_ref: (tm, tk)  activation tile
    w_ref: (tn, tk)  weight tile in native PyTorch (out, in) layout
    b_ref: (1,  tn)  bias tile
    o_ref: (tm, tn)  f32 output tile, used directly as the accumulator
                     (its block index is K-invariant -> stays resident in VMEM)
    """
    k = pl.program_id(2)

    @pl.when(k == 0)
    def _():
        # Fold the bias add into the accumulator init.
        o_ref[...] = jnp.broadcast_to(b_ref[...], o_ref.shape).astype(o_ref.dtype)

    # Contract x (tm, tk) with w (tn, tk) over K on the MXU -> (tm, tn),
    # accumulating in f32 directly into the resident output tile.
    o_ref[...] += lax.dot_general(
        x_ref[...], w_ref[...],
        dimension_numbers=(((1,), (1,)), ((), ())),
        preferred_element_type=jnp.float32,
    )


def _round_up(x, m):
    return ((x + m - 1) // m) * m


def _pick_tile(extent, target, base):
    """Largest multiple of `base` that divides `extent` and is <= target.

    `extent` is already a multiple of `base`, so `base` is a valid fallback.
    """
    target = min(target, extent)
    target = max(base, (target // base) * base)
    for d in range(target, base - 1, -base):
        if extent % d == 0:
            return d
    return base


def _vmem_budget_bytes():
    """Generation-aware VMEM budget: ~96 MiB on 128-MiB parts (v5e/v6e),
    ~48 MiB on v7x (64 MiB per TensorCore).  Conservative fallback if the
    hardware query is unavailable."""
    cap = None
    try:
        info = pltpu.get_tpu_info()
        cap = getattr(info, "vmem_capacity_bytes", None)
    except Exception:
        cap = None
    if cap is None:
        cap = 64 * 1024 * 1024  # assume the smallest (v7x per-core) VMEM
    if cap >= 100 * 1024 * 1024:
        return 96 * 1024 * 1024
    return 48 * 1024 * 1024


def linear_pallas(x, weight, bias, *, tm_target=1024, tn_target=1024, tk_target=512):
    """y = x @ weight.T + bias  (PyTorch nn.Linear semantics).

    x:      (B, input_size)            float32
    weight: (output_size, input_size)  float32  (native PyTorch layout)
    bias:   (output_size,)             float32
    returns (B, output_size)           float32
    """
    B, K = x.shape
    N, K2 = weight.shape
    assert K == K2, "weight input_size must match x feature dim"

    # Pad only to hardware granularity (M -> 8, K/N -> 128), not to tile size.
    Mp = _round_up(B, 8)
    Kp = _round_up(K, 128)
    Np = _round_up(N, 128)

    x_p = x if (Mp == B and Kp == K) else jnp.pad(x, ((0, Mp - B), (0, Kp - K)))
    w_p = weight if (Np == N and Kp == K) else jnp.pad(
        weight, ((0, Np - N), (0, Kp - K)))
    b_p = bias if Np == N else jnp.pad(bias, (0, Np - N))
    b2d = b_p.reshape(1, Np)  # 2-D for TPU-friendly lane broadcast

    # Tiles = divisors of the (lightly) padded extents.  Live VMEM at the
    # 1024x1024x512 target with 2-deep buffering is ~16-20 MiB, well inside
    # the per-generation budget.
    tm = _pick_tile(Mp, tm_target, 8)
    tn = _pick_tile(Np, tn_target, 128)
    tk = _pick_tile(Kp, tk_target, 128)

    # Make sure at least one "parallel" grid axis has >= 2 blocks so both
    # TensorCores on v7x get work (free ~2x for small-batch linears).
    if (Mp // tm) * (Np // tn) == 1 and Np >= 256:
        tn = _pick_tile(Np, Np // 2, 128)

    grid_m, grid_n, grid_k = Mp // tm, Np // tn, Kp // tk
    grid = (grid_m, grid_n, grid_k)

    vmem_limit = _vmem_budget_bytes()

    # Advisory cost: bytes reflect actual tiled re-streaming of x and W.
    bytes_accessed = 4 * (grid_n * Mp * Kp + grid_m * Np * Kp + Mp * Np)

    out = pl.pallas_call(
        linear_kernel,
        out_shape=jax.ShapeDtypeStruct((Mp, Np), jnp.float32),
        grid_spec=pltpu.PrefetchScalarGridSpec(
            num_scalar_prefetch=0,
            grid=grid,
            in_specs=[
                pl.BlockSpec((tm, tk), lambda i, j, k: (i, k)),   # x
                pl.BlockSpec((tn, tk), lambda i, j, k: (j, k)),   # weight (N, K)
                pl.BlockSpec((1, tn), lambda i, j, k: (0, j)),    # bias
            ],
            out_specs=pl.BlockSpec((tm, tn), lambda i, j, k: (i, j)),
        ),
        compiler_params=pltpu.CompilerParams(
            dimension_semantics=("parallel", "parallel", "arbitrary"),
            vmem_limit_bytes=vmem_limit,
        ),
        cost_estimate=pl.CostEstimate(
            flops=2 * Mp * Kp * Np,
            transcendentals=0,
            bytes_accessed=bytes_accessed,
        ),
    )(x_p, w_p, b2d)

    if Mp != B or Np != N:
        out = out[:B, :N]
    return out.astype(x.dtype)


def init_linear_params(key, input_size, output_size):
    """Deterministic init mimicking nn.Linear.reset_parameters()
    (kaiming-uniform weight with a=sqrt(5), uniform bias bound 1/sqrt(fan_in))."""
    kw, kb = jax.random.split(key)
    bound_w = math.sqrt(1.0 / input_size) * math.sqrt(3.0)
    weight = jax.random.uniform(
        kw, (output_size, input_size), jnp.float32, -bound_w, bound_w)
    bound_b = 1.0 / math.sqrt(input_size)
    bias = jax.random.uniform(
        kb, (output_size,), jnp.float32, -bound_b, bound_b)
    return weight, bias


if __name__ == "__main__":
    key = jax.random.PRNGKey(0)
    k_x, k_p = jax.random.split(key)

    batch = 8
    input_size = 32
    output_size = 16

    x = jax.random.normal(k_x, (batch, input_size), jnp.float32)
    weight, bias = init_linear_params(k_p, input_size, output_size)

    y = linear_pallas(x, weight, bias)
    jax.block_until_ready(y)

    # Sanity check against the plain-JAX reference of nn.Linear.forward.
    y_ref = x @ weight.T + bias
    assert y.shape == (batch, output_size)
    assert jnp.allclose(y, y_ref, atol=1e-5, rtol=1e-5)

    print("KERNEL_OK")
</pallas_src>

<mosaic_0001>
module attributes {stable_mosaic.version = 11 : i64} {
  func.func @linear_kernel(%arg0: i32, %arg1: i32, %arg2: i32, %arg3: memref<8x128xf32, #tpu.memory_space<vmem>>, %arg4: memref<128x128xf32, #tpu.memory_space<vmem>>, %arg5: memref<1x128xf32, #tpu.memory_space<vmem>>, %arg6: memref<8x128xf32, #tpu.memory_space<vmem>>) attributes {dimension_semantics = [#tpu.dimension_semantics<parallel>, #tpu.dimension_semantics<parallel>, #tpu.dimension_semantics<arbitrary>], iteration_bounds = array<i64: 1, 1, 1>, scalar_prefetch = 0 : i64, scratch_operands = 0 : i64, tpu.core_type = #tpu.core_type<tc>, window_params = [{transform_indices = @transform_0, window_bounds = array<i64: 8, 128>}, {transform_indices = @transform_1, window_bounds = array<i64: 128, 128>}, {transform_indices = @transform_2, window_bounds = array<i64: 1, 128>}, {transform_indices = @transform_3, window_bounds = array<i64: 8, 128>}]} {
    %c0_i32 = arith.constant 0 : i32
    %0 = arith.cmpi eq, %arg2, %c0_i32 : i32
    %1 = arith.extui %0 : i1 to i32
    %c0_i32_0 = arith.constant 0 : i32
    %2 = arith.cmpi ne, %1, %c0_i32_0 : i32
    scf.if %2 {
      %c0_8 = arith.constant 0 : index
      %c0_9 = arith.constant 0 : index
      %9 = vector.load %arg5[%c0_8, %c0_9] : memref<1x128xf32, #tpu.memory_space<vmem>>, vector<1x128xf32>
      %10 = vector.shape_cast %9 : vector<1x128xf32> to vector<1x128xf32>
      %11 = vector.broadcast %10 : vector<1x128xf32> to vector<8x128xf32>
      %c0_10 = arith.constant 0 : index
      %c0_11 = arith.constant 0 : index
      %12 = vector.load %arg6[%c0_10, %c0_11] : memref<8x128xf32, #tpu.memory_space<vmem>>, vector<8x128xf32>
      tpu.vector_store %arg6[%c0_10, %c0_11], %11 {strides = array<i32>} : memref<8x128xf32, #tpu.memory_space<vmem>>, vector<8x128xf32>,
    } else {
    }
    %c0 = arith.constant 0 : index
    %c0_1 = arith.constant 0 : index
    %3 = vector.load %arg6[%c0, %c0_1] : memref<8x128xf32, #tpu.memory_space<vmem>>, vector<8x128xf32>
    %c0_2 = arith.constant 0 : index
    %c0_3 = arith.constant 0 : index
    %4 = vector.load %arg3[%c0_2, %c0_3] : memref<8x128xf32, #tpu.memory_space<vmem>>, vector<8x128xf32>
    %c0_4 = arith.constant 0 : index
    %c0_5 = arith.constant 0 : index
    %5 = vector.load %arg4[%c0_4, %c0_5] : memref<128x128xf32, #tpu.memory_space<vmem>>, vector<128x128xf32>
    %cst = arith.constant dense<0.000000e+00> : vector<8x128xf32>
    %6 = tpu.matmul %4, %5, %cst {dimension_numbers = #tpu.dot_dimension_numbers<[1], [1], [0], [0], [0, 0, 1, 0], [], []>} : vector<8x128xf32>, vector<128x128xf32>, vector<8x128xf32> -> vector<8x128xf32>
    %7 = arith.addf %3, %6 : vector<8x128xf32>
    %c0_6 = arith.constant 0 : index
    %c0_7 = arith.constant 0 : index
    %8 = vector.load %arg6[%c0_6, %c0_7] : memref<8x128xf32, #tpu.memory_space<vmem>>, vector<8x128xf32>
    tpu.vector_store %arg6[%c0_6, %c0_7], %7 {strides = array<i32>} : memref<8x128xf32, #tpu.memory_space<vmem>>, vector<8x128xf32>,
    return
  }
  func.func @transform_0(%arg0: i32, %arg1: i32, %arg2: i32) -> (i32, i32) {
    %c0_i32 = arith.constant 0 : i32
    return %arg0, %arg2 : i32, i32
  }
  func.func @transform_1(%arg0: i32, %arg1: i32, %arg2: i32) -> (i32, i32) {
    %c0_i32 = arith.constant 0 : i32
    return %arg1, %arg2 : i32, i32
  }
  func.func @transform_2(%arg0: i32, %arg1: i32, %arg2: i32) -> (i32, i32) {
    %c0_i32 = arith.constant 0 : i32
    %c0_i32_0 = arith.constant 0 : i32
    return %c0_i32, %arg1 : i32, i32
  }
  func.func @transform_3(%arg0: i32, %arg1: i32, %arg2: i32) -> (i32, i32) {
    %c0_i32 = arith.constant 0 : i32
    return %arg0, %arg1 : i32, i32
  }
}

</mosaic_0001>

<llo_original>
// kernel: tpu_custom_call.1
$region0: #{tpu_custom_call.1}
  #allocation0 [shape = 'u32[]', space=smem, size = 0x4, offset = 0x4, fixed_abs, tag = 'smem constant byte address 0x4 - core index']
  #allocation1 [shape = 'u32[144,128]{1,0:T(1,128)}', space=vmem, size = 0x12000, scoped, tag = 'internal scratch']
  %s0 = inlined_call_operand.hbm [shape: f32[8,128], index: 0, kind: input, shape index: {}]
  %s1 = inlined_call_operand.hbm [shape: f32[128,128], index: 1, kind: input, shape index: {}]
  %s2 = inlined_call_operand.vmem [shape: f32[1,128], index: 2, kind: input, shape index: {}]
  %s3 = inlined_call_operand.hbm [shape: f32[8,128], index: 3, kind: output, shape index: {}]
  %s4 = sld [smem:[#allocation0]]
  $region34: #{tpu_custom_call.1} parent=0
    _
  %s6 = ssub.s32 1, %s4
  %s7 = scalar_select 0, %s6, %s4
  $region1: #{tpu_custom_call.1} parent=0
    #allocation2 [shape = 'u8[4096]{0}', space=vmem, size = 0x1000, scoped, tag = 'input window, operand 0, single buffered']
    #allocation3 [shape = 's32[1]{0}', space=sflag, size = 0x4, scoped, tag = 'scoped memory for tpu_custom_call.1']
    #allocation4 [shape = 's32[1]{0}', space=sflag, size = 0x4, scoped, tag = 'scoped memory for tpu_custom_call.1']
    #allocation5 [shape = 'u8[65536]{0}', space=vmem, size = 0x10000, scoped, tag = 'input window, operand 1, single buffered']
    #allocation6 [shape = 's32[1]{0}', space=sflag, size = 0x4, scoped, tag = 'scoped memory for tpu_custom_call.1']
    #allocation7 [shape = 'u8[4096]{0}', space=vmem, size = 0x1000, scoped, tag = 'output window, operand 0, single buffered']
    %8 = vsyncpa [#allocation3], 0
    %9 = vsyncpa [#allocation6], 0
    %10 = vsyncpa [#allocation4], 0
    // Predicated region
    $region2: #{tpu_custom_call.1} parent=1 // pred_check
      _
    $region3: #{tpu_custom_call.1} parent=1 // pred_check_branch
      %12 = sbr.rel (0) target = $region5
    $region4: #{tpu_custom_call.1} parent=1 // pred_region
      %s14 = ssub.s32 128, 128
      %15 = vsyncadd [#allocation3], %s14
      %s17 = sshll.u32 [#allocation2], 4
      %s18 = int_to_ptr.vmem [resolvable:$true] %s17
      %20 = dma.hbm_to_vmem [thread:$0]  %s0, 128, %s18, [#allocation3]
    $region5: #{tpu_custom_call.1} parent=1 // pred_fallthru
      _
    // Predicated region
    $region6: #{tpu_custom_call.1} parent=1 // pred_check
      _
    $region7: #{tpu_custom_call.1} parent=1 // pred_check_branch
      %22 = sbr.rel (0) target = $region9
    $region8: #{tpu_custom_call.1} parent=1 // pred_region
      %s24 = ssub.s32 2048, 2048
      %25 = vsyncadd [#allocation6], %s24
      %s26 = sshll.u32 [#allocation5], 4
      %s27 = int_to_ptr.vmem [resolvable:$true] %s26
      %32 = dma.hbm_to_vmem [thread:$0]  %s1, 2048, %s27, [#allocation6], 128, 128, 8
    $region9: #{tpu_custom_call.1} parent=1 // pred_fallthru
      _
    // Predicated region
    $region10: #{tpu_custom_call.1} parent=1 // pred_check
      _
    $region11: #{tpu_custom_call.1} parent=1 // pred_check_branch
      %34 = sbr.rel (0) target = $region13
    $region12: #{tpu_custom_call.1} parent=1 // pred_region
      _
    $region13: #{tpu_custom_call.1} parent=1 // pred_fallthru
      _
    // Predicated region
    $region14: #{tpu_custom_call.1} parent=1 // pred_check
      _
    $region15: #{tpu_custom_call.1} parent=1 // pred_check_branch
      %36 = sbr.rel (0) target = $region17
    $region16: #{tpu_custom_call.1} parent=1 // pred_region
      %37 = dma.done [#allocation3], 128
    $region17: #{tpu_custom_call.1} parent=1 // pred_fallthru
      _
    // Predicated region
    $region18: #{tpu_custom_call.1} parent=1 // pred_check
      _
    $region19: #{tpu_custom_call.1} parent=1 // pred_check_branch
      %39 = sbr.rel (0) target = $region21
    $region20: #{tpu_custom_call.1} parent=1 // pred_region
      %40 = dma.done [#allocation6], 2048
    $region21: #{tpu_custom_call.1} parent=1 // pred_fallthru
      _
    %p41 = scmp.eq.s32.totalorder 0, 0
    // Predicated region
    $region22: #{tpu_custom_call.1} parent=1 // pred_check
      %p42 = pneg %p41
    $region23: #{tpu_custom_call.1} parent=1 // pred_check_branch
      %44 = sbr.rel (%p42) target = $region25
    $region24: #{tpu_custom_call.1} parent=1 // pred_region
      %v45 = vld [vmem:[%s2] sm:$0x1]
      %v47 = vlaneseq
      %v48 = vshrl.u32 %v47, 7
      %v49 = vsub.s32 0, %v48
      %v50 = vrot.slane %v45, %v49
      %52 = vst [vmem:[#allocation7] sm:$0xff] %v50
    $region25: #{tpu_custom_call.1} parent=1 // pred_fallthru
      _
    %v53 = vld [vmem:[#allocation7] sm:$0xff]
    %v54 = vld [vmem:[#allocation2] sm:$0xff]
    %v55 = vld [vmem:[#allocation5] sm:$0xff]
    %v56 = vld [vmem:[#allocation5 + $0x8] sm:$0xff]
    %v57 = vld [vmem:[#allocation5 + $0x10] sm:$0xff]
    %v58 = vld [vmem:[#allocation5 + $0x18] sm:$0xff]
    %v59 = vld [vmem:[#allocation5 + $0x20] sm:$0xff]
    %v60 = vld [vmem:[#allocation5 + $0x28] sm:$0xff]
    %v61 = vld [vmem:[#allocation5 + $0x30] sm:$0xff]
    %v62 = vld [vmem:[#allocation5 + $0x38] sm:$0xff]
    %v63 = vld [vmem:[#allocation5 + $0x40] sm:$0xff]
    %v64 = vld [vmem:[#allocation5 + $0x48] sm:$0xff]
    %v65 = vld [vmem:[#allocation5 + $0x50] sm:$0xff]
    %v66 = vld [vmem:[#allocation5 + $0x58] sm:$0xff]
    %v67 = vld [vmem:[#allocation5 + $0x60] sm:$0xff]
    %v68 = vld [vmem:[#allocation5 + $0x68] sm:$0xff]
    %v69 = vld [vmem:[#allocation5 + $0x70] sm:$0xff]
    %v70 = vld [vmem:[#allocation5 + $0x78] sm:$0xff]
    %71 = vmatprep.subr.mxu0 0.0
    %72 = vmatpush1.xpose.msra.mxu0 %v55
    %73 = vmatprep.subr.mxu0 0.0
    %74 = vmatpush1.xpose.msra.mxu0 %v56
    %75 = vmatprep.subr.mxu0 0.0
    %76 = vmatpush1.xpose.msra.mxu0 %v57
    %77 = vmatprep.subr.mxu0 0.0
    %78 = vmatpush1.xpose.msra.mxu0 %v58
    %79 = vmatprep.subr.mxu0 0.0
    %80 = vmatpush1.xpose.msra.mxu0 %v59
    %81 = vmatprep.subr.mxu0 0.0
    %82 = vmatpush1.xpose.msra.mxu0 %v60
    %83 = vmatprep.subr.mxu0 0.0
    %84 = vmatpush1.xpose.msra.mxu0 %v61
    %85 = vmatprep.subr.mxu0 0.0
    %86 = vmatpush1.xpose.msra.mxu0 %v62
    %87 = vmatprep.subr.mxu0 0.0
    %88 = vmatpush1.xpose.msra.mxu0 %v63
    %89 = vmatprep.subr.mxu0 0.0
    %90 = vmatpush1.xpose.msra.mxu0 %v64
    %91 = vmatprep.subr.mxu0 0.0
    %92 = vmatpush1.xpose.msra.mxu0 %v65
    %93 = vmatprep.subr.mxu0 0.0
    %94 = vmatpush1.xpose.msra.mxu0 %v66
    %95 = vmatprep.subr.mxu0 0.0
    %96 = vmatpush1.xpose.msra.mxu0 %v67
    %97 = vmatprep.subr.mxu0 0.0
    %98 = vmatpush1.xpose.msra.mxu0 %v68
    %99 = vmatprep.subr.mxu0 0.0
    %100 = vmatpush1.xpose.msra.mxu0 %v69
    %101 = vmatprep.subr.mxu0 0.0
    %102 = vmatpush1.xpose.msra.mxu0 %v70
    %103 = vmatprep.subr.mxu0 0.0
    %104 = vmatpush1.xpose.msra.mxu0 0.0
    %105 = vmatprep.subr.mxu0 0.0
    %106 = vmatpush1.xpose.msra.mxu0 0.0
    %107 = vmatprep.subr.mxu0 0.0
    %108 = vmatpush1.xpose.msra.mxu0 0.0
    %109 = vmatprep.subr.mxu0 0.0
    %110 = vmatpush1.xpose.msra.mxu0 0.0
    %111 = vmatprep.subr.mxu0 0.0
    %112 = vmatpush1.xpose.msra.mxu0 0.0
    %113 = vmatprep.subr.mxu0 0.0
    %114 = vmatpush1.xpose.msra.mxu0 0.0
    %115 = vmatprep.subr.mxu0 0.0
    %116 = vmatpush1.xpose.msra.mxu0 0.0
    %117 = vmatprep.subr.mxu0 0.0
    %118 = vmatpush1.xpose.msra.mxu0 0.0
    %119 = vmatprep.subr.mxu0 0.0
    %120 = vmatpush1.xpose.msra.mxu0 0.0
    %121 = vmatprep.subr.mxu0 0.0
    %122 = vmatpush1.xpose.msra.mxu0 0.0
    %123 = vmatprep.subr.mxu0 0.0
    %124 = vmatpush1.xpose.msra.mxu0 0.0
    %125 = vmatprep.subr.mxu0 0.0
    %126 = vmatpush1.xpose.msra.mxu0 0.0
    %127 = vmatprep.subr.mxu0 0.0
    %128 = vmatpush1.xpose.msra.mxu0 0.0
    %129 = vmatprep.subr.mxu0 0.0
    %130 = vmatpush1.xpose.msra.mxu0 0.0
    %131 = vmatprep.subr.mxu0 0.0
    %132 = vmatpush1.xpose.msra.mxu0 0.0
    %133 = vmatprep.subr.mxu0 0.0
    %134 = vmatpush1.xpose.msra.mxu0 0.0
    %135 = vmatprep.mubr.f32.mxu0 0.0
    %136 = vmatmul.mubr.f32.gmra.mrb[0].mxu0 %v54
    %v137 = vpop.f32.mrb[0].mxu0
    %v138 = vadd.f32 0.0, %v137
    %v139 = vpop.f32.mrb[0].mxu0
    %140 = vdwg.mxu0
    %v141 = vadd.f32 %v53, %v138
    %142 = vst [vmem:[#allocation7] sm:$0xff] %v141
    // Predicated region
    $region26: #{tpu_custom_call.1} parent=1 // pred_check
      _
    $region27: #{tpu_custom_call.1} parent=1 // pred_check_branch
      %144 = sbr.rel (0) target = $region29
    $region28: #{tpu_custom_call.1} parent=1 // pred_region
      %s146 = ssub.s32 128, 128
      %147 = vsyncadd [#allocation4], %s146
      %s149 = sshll.u32 [#allocation7], 4
      %s150 = int_to_ptr.vmem [resolvable:$true] %s149
      %152 = dma.vmem_to_hbm [thread:$0]  %s150, 128, %s3, [#allocation4]
    $region29: #{tpu_custom_call.1} parent=1 // pred_fallthru
      _
    // Predicated region
    $region30: #{tpu_custom_call.1} parent=1 // pred_check
      _
    $region31: #{tpu_custom_call.1} parent=1 // pred_check_branch
      %154 = sbr.rel (0) target = $region33
    $region32: #{tpu_custom_call.1} parent=1 // pred_region
      %155 = dma.done [#allocation4], 128
    $region33: #{tpu_custom_call.1} parent=1 // pred_fallthru
      _
    %156 = vsyncpa [#allocation3], 1
    %157 = vsyncpa [#allocation6], 1
    %158 = vsyncpa [#allocation4], 1

</llo_original>
